<compile_context>
chip_gen: v5e
topology: v5e:2x2
jax: 0.10.0
libtpu: 0.0.40
codegen_flags: <defaults>
</compile_context>

<pallas_src>
import jax
import jax.numpy as jnp
from jax.experimental import pallas as pl
from jax.experimental.pallas import tpu as pltpu

HIDDEN = 312          # BERT hidden / qa head input size (rubert-tiny style)
NUM_LABELS = 2        # start / end logits
LANE = 128


def _round_up(x, m):
    return ((x + m - 1) // m) * m


# ----------------------------------------------------------------------------
# One-time parameter preparation for the head (hoisted out of the forward).
# Weights become bf16 with the *output* dim padded to a multiple of 128; the
# input dim of every layer after the first is padded to match the (padded)
# output width of the previous layer.  Zero padding keeps the math exact.
# ----------------------------------------------------------------------------
def prepare_head_params(layers):
    prepared = []
    for idx, (w, b) in enumerate(layers):
        din, dout = w.shape
        din_p = din if idx == 0 else _round_up(din, LANE)   # first layer eats raw 312-wide acts
        dout_p = _round_up(dout, LANE)
        wp = jnp.pad(w, ((0, din_p - din), (0, dout_p - dout))).astype(jnp.bfloat16)
        bp = jnp.pad(b, (0, dout_p - dout)).reshape(1, dout_p).astype(jnp.float32)
        prepared.append((wp, bp))
    return prepared


# ----------------------------------------------------------------------------
# Kernel 1: fused qa_outputs head  (BlockList of Linear+ReLU, then fc Linear)
# Output is the compact transposed slab: row 0 = start logits, row 1 = end
# logits, token index on the lane axis.
# ----------------------------------------------------------------------------
def _head_kernel(x_ref, *refs):
    out_ref = refs[-1]
    params = refs[:-1]
    n_layers = len(params) // 2

    h = x_ref[...].astype(jnp.bfloat16)               # (tile_m, H) bf16 for the MXU
    for i in range(n_layers):
        w = params[2 * i][...]                        # bf16 (din_p, dout_p)
        b = params[2 * i + 1][...]                    # f32  (1, dout_p)
        acc = jnp.dot(h, w, preferred_element_type=jnp.float32) + b
        if i < n_layers - 1:                          # ReLU inside every Block, not after final fc
            h = jnp.maximum(acc, 0.0).astype(jnp.bfloat16)
        else:
            h = acc                                   # final layer stays f32
        # TODO(synk): nn.Dropout(p=0.25) is identity in eval mode; train-mode
        # stochastic dropout (pltpu.prng_random_bits) is not emitted here.

    # Compact transposed store: (tile_m, 128) -> (128, tile_m) on the XLU
    # (MXU/VALU are idle at this point), keep only the 2 real label rows.
    logits_t = h.T                                    # (dout_p, tile_m) f32
    out_ref[...] = logits_t[:out_ref.shape[0], :].astype(out_ref.dtype)


def qa_head(x, prepared_layers, *, max_tile_m=1024):
    """x: [N, HIDDEN] (f32 or bf16) -> compact logits slab [NUM_LABELS, Np] f32.

    Rows are padded (if needed) to a multiple of tile_m; tile_m is a multiple
    of 128 and capped so the grid keeps >=2 parallel steps when possible (v7x
    dual TensorCores).  Features use their natural width (full-extent blocks);
    weights are pre-padded/bf16 by prepare_head_params.
    """
    N, H = x.shape

    tile_m = min(max_tile_m, _round_up(N, LANE))
    if _round_up(N, tile_m) // tile_m < 2 and tile_m >= 2 * LANE:
        tile_m = _round_up(tile_m // 2, LANE)         # keep both TCs busy on v7x
    Np = _round_up(N, tile_m)

    x_in = x if Np == N else jnp.pad(x, ((0, Np - N), (0, 0)))

    in_specs = [pl.BlockSpec((tile_m, H), lambda i: (i, 0))]
    args = [x_in]
    for (wp, bp) in prepared_layers:                  # resident: constant index_map
        in_specs.append(pl.BlockSpec(wp.shape, lambda i: (0, 0)))
        in_specs.append(pl.BlockSpec(bp.shape, lambda i: (0, 0)))
        args.append(wp)
        args.append(bp)

    out = pl.pallas_call(
        _head_kernel,
        out_shape=jax.ShapeDtypeStruct((NUM_LABELS, Np), jnp.float32),
        grid=(Np // tile_m,),
        in_specs=in_specs,
        out_specs=pl.BlockSpec((NUM_LABELS, tile_m), lambda i: (0, i)),
        compiler_params=pltpu.CompilerParams(
            dimension_semantics=("parallel",)),
    )(*args)
    return out                                        # caller slices [:, :N]


# ----------------------------------------------------------------------------
# Kernel 2: QA cross-entropy loss   total = (CE(start) + CE(end)) / 2
# One-hot targets are built in-kernel from the int32 positions (no dense
# one-hot matrices shipped through HBM).
# ----------------------------------------------------------------------------
def _qa_loss_kernel(sl_ref, el_ref, sp_ref, ep_ref, out_ref):
    S = sl_ref.shape[-1]
    ignored_index = S

    def masked_ce(logits, pos):
        pos_c = jnp.clip(pos, 0, ignored_index)                 # (B, 1) int32
        valid = (pos_c < ignored_index).astype(jnp.float32)     # (B, 1)
        col = jax.lax.broadcasted_iota(jnp.int32, logits.shape, 1)
        onehot = (col == pos_c).astype(jnp.float32)             # pos==S -> all-zero row
        m = jnp.max(logits, axis=-1, keepdims=True)
        lse = m + jnp.log(jnp.sum(jnp.exp(logits - m), axis=-1, keepdims=True))
        tgt = jnp.sum(logits * onehot, axis=-1, keepdims=True)
        per_ex = (lse - tgt) * valid
        denom = jnp.maximum(jnp.sum(valid), 1.0)
        return jnp.sum(per_ex) / denom

    sl = sl_ref[...].astype(jnp.float32)
    el = el_ref[...].astype(jnp.float32)
    out_ref[0, 0] = 0.5 * (masked_ce(sl, sp_ref[...]) + masked_ce(el, ep_ref[...]))


def qa_loss(start_logits, end_logits, start_pos, end_pos):
    B, S = start_logits.shape
    sp = start_pos.reshape(B, 1).astype(jnp.int32)
    ep = end_pos.reshape(B, 1).astype(jnp.int32)

    # TODO(synk): for large B*S tile this over B with a scratch accumulator and
    # move the positions to SMEM scalar-prefetch instead of (B,1) VMEM blocks.
    full = lambda shape: pl.BlockSpec(shape, lambda i: (0, 0))
    loss = pl.pallas_call(
        _qa_loss_kernel,
        out_shape=jax.ShapeDtypeStruct((1, 1), jnp.float32),
        grid=(1,),
        in_specs=[full((B, S)), full((B, S)), full((B, 1)), full((B, 1))],
        out_specs=pl.BlockSpec((1, 1), lambda i: (0, 0)),
    )(start_logits, end_logits, sp, ep)
    return loss[0, 0]


# ----------------------------------------------------------------------------
# Parameter construction (deterministic, in-script)
# ----------------------------------------------------------------------------
def init_params(key, vocab_size, count_of_blocks, hid_size):
    keys = jax.random.split(key, 16)
    params = {
        "word_emb": jax.random.normal(keys[0], (vocab_size, HIDDEN), jnp.float32) * 0.02,
        "type_emb": jax.random.normal(keys[1], (2, HIDDEN), jnp.float32) * 0.02,
    }
    # BlockList(count_of_blocks, in=312, hid_size1=hid_size, out=312)
    dims = []
    if count_of_blocks == 1:
        dims = [(HIDDEN, HIDDEN)]
    elif count_of_blocks >= 2:
        dims = [(HIDDEN, hid_size)]
        dims += [(hid_size, hid_size)] * (count_of_blocks - 2)
        dims += [(hid_size, HIDDEN)]
    dims += [(HIDDEN, NUM_LABELS)]        # final fc

    layers = []
    k = 2
    for (din, dout) in dims:
        w = jax.random.normal(keys[k], (din, dout), jnp.float32) * 0.02
        b = jax.random.normal(keys[k + 1], (dout,), jnp.float32) * 0.02
        layers.append((w, b))
        k += 2
    params["layers"] = layers                          # raw f32 reference params
    params["head"] = prepare_head_params(layers)       # padded bf16, kernel-ready
    return params


# ----------------------------------------------------------------------------
# Full forward (mirrors gptKILLER.forward signature)
# ----------------------------------------------------------------------------
def gpt_killer_forward(params, question, types, attention_mask, start, end):
    B, S = question.shape
    # TODO(synk): the frozen pretrained BERT encoder (pipeline.model.bert) has
    # no clean in-script equivalent; replaced by a deterministic embedding stub.
    seq = params["word_emb"][question] + params["type_emb"][types]
    seq = seq * attention_mask[..., None].astype(seq.dtype)
    # bf16 cast fused into the embedding producer (no extra HBM pass).
    x = seq.astype(jnp.bfloat16).reshape(B * S, HIDDEN)

    slab = qa_head(x, params["head"])                  # [2, Np] compact (Pallas)
    N = B * S
    start_logits = slab[0, :N].reshape(B, S)           # contiguous row slices
    end_logits = slab[1, :N].reshape(B, S)

    total_loss = qa_loss(start_logits, end_logits, start, end)  # (Pallas)
    return {"loss": total_loss,
            "start_logits": start_logits,
            "end_logits": end_logits}


if __name__ == "__main__":
    key = jax.random.PRNGKey(0)
    B, S, VOCAB = 2, 8, 50
    COUNT_OF_BLOCKS, HID_SIZE = 2, 64

    pkey, qkey = jax.random.split(key)
    params = init_params(pkey, VOCAB, COUNT_OF_BLOCKS, HID_SIZE)

    question = jax.random.randint(qkey, (B, S), 0, VOCAB, dtype=jnp.int32)
    types = jnp.concatenate(
        [jnp.zeros((B, S // 2), jnp.int32), jnp.ones((B, S // 2), jnp.int32)], axis=1)
    attention_mask = jnp.ones((B, S), jnp.int32)
    start = jnp.array([1, 3], jnp.int32)
    end = jnp.array([4, 6], jnp.int32)

    out = gpt_killer_forward(params, question, types, attention_mask, start, end)
    jax.block_until_ready(out)
    assert out["start_logits"].shape == (B, S)
    assert out["end_logits"].shape == (B, S)
    assert out["loss"].shape == ()
    print("KERNEL_OK")
</pallas_src>

<mosaic_0001>
module attributes {stable_mosaic.version = 11 : i64} {
  func.func @_head_kernel(%arg0: i32, %arg1: memref<128x312xbf16, #tpu.memory_space<vmem>>, %arg2: memref<312x128xbf16, #tpu.memory_space<vmem>>, %arg3: memref<1x128xf32, #tpu.memory_space<vmem>>, %arg4: memref<128x384xbf16, #tpu.memory_space<vmem>>, %arg5: memref<1x384xf32, #tpu.memory_space<vmem>>, %arg6: memref<384x128xbf16, #tpu.memory_space<vmem>>, %arg7: memref<1x128xf32, #tpu.memory_space<vmem>>, %arg8: memref<2x128xf32, #tpu.memory_space<vmem>>) attributes {dimension_semantics = [#tpu.dimension_semantics<parallel>], iteration_bounds = array<i64: 1>, scalar_prefetch = 0 : i64, scratch_operands = 0 : i64, tpu.core_type = #tpu.core_type<tc>, window_params = [{transform_indices = @transform_0, window_bounds = array<i64: 128, 312>}, {pipeline_mode = #tpu.pipeline_mode<synchronous>, transform_indices = @transform_1, window_bounds = array<i64: 312, 128>}, {pipeline_mode = #tpu.pipeline_mode<synchronous>, transform_indices = @transform_2, window_bounds = array<i64: 1, 128>}, {pipeline_mode = #tpu.pipeline_mode<synchronous>, transform_indices = @transform_3, window_bounds = array<i64: 128, 384>}, {pipeline_mode = #tpu.pipeline_mode<synchronous>, transform_indices = @transform_4, window_bounds = array<i64: 1, 384>}, {pipeline_mode = #tpu.pipeline_mode<synchronous>, transform_indices = @transform_5, window_bounds = array<i64: 384, 128>}, {pipeline_mode = #tpu.pipeline_mode<synchronous>, transform_indices = @transform_6, window_bounds = array<i64: 1, 128>}, {transform_indices = @transform_7, window_bounds = array<i64: 2, 128>}]} {
    %c0 = arith.constant 0 : index
    %c0_0 = arith.constant 0 : index
    %0 = vector.load %arg1[%c0, %c0_0] : memref<128x312xbf16, #tpu.memory_space<vmem>>, vector<128x312xbf16>
    %c0_1 = arith.constant 0 : index
    %c0_2 = arith.constant 0 : index
    %1 = vector.load %arg2[%c0_1, %c0_2] : memref<312x128xbf16, #tpu.memory_space<vmem>>, vector<312x128xbf16>
    %c0_3 = arith.constant 0 : index
    %c0_4 = arith.constant 0 : index
    %2 = vector.load %arg3[%c0_3, %c0_4] : memref<1x128xf32, #tpu.memory_space<vmem>>, vector<1x128xf32>
    %cst = arith.constant dense<0.000000e+00> : vector<128x128xf32>
    %3 = tpu.matmul %0, %1, %cst {dimension_numbers = #tpu.dot_dimension_numbers<[1], [0], [0], [1], [0, 0, 1, 1], [], []>} : vector<128x312xbf16>, vector<312x128xbf16>, vector<128x128xf32> -> vector<128x128xf32>
    %4 = vector.broadcast %2 : vector<1x128xf32> to vector<128x128xf32>
    %5 = arith.addf %3, %4 : vector<128x128xf32>
    %cst_5 = arith.constant 0.000000e+00 : f32
    %6 = vector.broadcast %cst_5 : f32 to vector<128x128xf32>
    %7 = arith.maximumf %5, %6 : vector<128x128xf32>
    %8 = arith.truncf %7 : vector<128x128xf32> to vector<128x128xbf16>
    %c0_6 = arith.constant 0 : index
    %c0_7 = arith.constant 0 : index
    %9 = vector.load %arg4[%c0_6, %c0_7] : memref<128x384xbf16, #tpu.memory_space<vmem>>, vector<128x384xbf16>
    %c0_8 = arith.constant 0 : index
    %c0_9 = arith.constant 0 : index
    %10 = vector.load %arg5[%c0_8, %c0_9] : memref<1x384xf32, #tpu.memory_space<vmem>>, vector<1x384xf32>
    %cst_10 = arith.constant dense<0.000000e+00> : vector<128x384xf32>
    %11 = tpu.matmul %8, %9, %cst_10 {dimension_numbers = #tpu.dot_dimension_numbers<[1], [0], [0], [1], [0, 0, 1, 1], [], []>} : vector<128x128xbf16>, vector<128x384xbf16>, vector<128x384xf32> -> vector<128x384xf32>
    %12 = vector.broadcast %10 : vector<1x384xf32> to vector<128x384xf32>
    %13 = arith.addf %11, %12 : vector<128x384xf32>
    %cst_11 = arith.constant 0.000000e+00 : f32
    %14 = vector.broadcast %cst_11 : f32 to vector<128x384xf32>
    %15 = arith.maximumf %13, %14 : vector<128x384xf32>
    %16 = arith.truncf %15 : vector<128x384xf32> to vector<128x384xbf16>
    %c0_12 = arith.constant 0 : index
    %c0_13 = arith.constant 0 : index
    %17 = vector.load %arg6[%c0_12, %c0_13] : memref<384x128xbf16, #tpu.memory_space<vmem>>, vector<384x128xbf16>
    %c0_14 = arith.constant 0 : index
    %c0_15 = arith.constant 0 : index
    %18 = vector.load %arg7[%c0_14, %c0_15] : memref<1x128xf32, #tpu.memory_space<vmem>>, vector<1x128xf32>
    %cst_16 = arith.constant dense<0.000000e+00> : vector<128x128xf32>
    %19 = tpu.matmul %16, %17, %cst_16 {dimension_numbers = #tpu.dot_dimension_numbers<[1], [0], [0], [1], [0, 0, 1, 1], [], []>} : vector<128x384xbf16>, vector<384x128xbf16>, vector<128x128xf32> -> vector<128x128xf32>
    %20 = vector.broadcast %18 : vector<1x128xf32> to vector<128x128xf32>
    %21 = arith.addf %19, %20 : vector<128x128xf32>
    %22 = tpu.transpose %21, [1, 0] : vector<128x128xf32> -> vector<128x128xf32>
    %23 = vector.extract_strided_slice %22 {offsets = [0, 0], sizes = [2, 128], strides = [1, 1]} : vector<128x128xf32> to vector<2x128xf32>
    %c0_17 = arith.constant 0 : index
    %c0_18 = arith.constant 0 : index
    %24 = vector.load %arg8[%c0_17, %c0_18] : memref<2x128xf32, #tpu.memory_space<vmem>>, vector<2x128xf32>
    tpu.vector_store %arg8[%c0_17, %c0_18], %23 {strides = array<i32>} : memref<2x128xf32, #tpu.memory_space<vmem>>, vector<2x128xf32>,
    return
  }
  func.func @transform_0(%arg0: i32) -> (i32, i32) {
    %c0_i32 = arith.constant 0 : i32
    %c0_i32_0 = arith.constant 0 : i32
    return %arg0, %c0_i32 : i32, i32
  }
  func.func @transform_1(%arg0: i32) -> (i32, i32) {
    %c0_i32 = arith.constant 0 : i32
    %c0_i32_0 = arith.constant 0 : i32
    %c0_i32_1 = arith.constant 0 : i32
    return %c0_i32, %c0_i32_0 : i32, i32
  }
  func.func @transform_2(%arg0: i32) -> (i32, i32) {
    %c0_i32 = arith.constant 0 : i32
    %c0_i32_0 = arith.constant 0 : i32
    %c0_i32_1 = arith.constant 0 : i32
    return %c0_i32, %c0_i32_0 : i32, i32
  }
  func.func @transform_3(%arg0: i32) -> (i32, i32) {
    %c0_i32 = arith.constant 0 : i32
    %c0_i32_0 = arith.constant 0 : i32
    %c0_i32_1 = arith.constant 0 : i32
    return %c0_i32, %c0_i32_0 : i32, i32
  }
  func.func @transform_4(%arg0: i32) -> (i32, i32) {
    %c0_i32 = arith.constant 0 : i32
    %c0_i32_0 = arith.constant 0 : i32
    %c0_i32_1 = arith.constant 0 : i32
    return %c0_i32, %c0_i32_0 : i32, i32
  }
  func.func @transform_5(%arg0: i32) -> (i32, i32) {
    %c0_i32 = arith.constant 0 : i32
    %c0_i32_0 = arith.constant 0 : i32
    %c0_i32_1 = arith.constant 0 : i32
    return %c0_i32, %c0_i32_0 : i32, i32
  }
  func.func @transform_6(%arg0: i32) -> (i32, i32) {
    %c0_i32 = arith.constant 0 : i32
    %c0_i32_0 = arith.constant 0 : i32
    %c0_i32_1 = arith.constant 0 : i32
    return %c0_i32, %c0_i32_0 : i32, i32
  }
  func.func @transform_7(%arg0: i32) -> (i32, i32) {
    %c0_i32 = arith.constant 0 : i32
    %c0_i32_0 = arith.constant 0 : i32
    return %c0_i32, %arg0 : i32, i32
  }
}

</mosaic_0001>

<llo_original>
// kernel: tpu_custom_call.1
$region0: #{tpu_custom_call.1}
  #allocation0 [shape = 'u32[]', space=smem, size = 0x4, offset = 0x4, fixed_abs, tag = 'smem constant byte address 0x4 - core index']
  #allocation1 [shape = 'u32[72,128]{1,0:T(1,128)}', space=vmem, size = 0x9000, scoped, tag = 'internal scratch']
  %s0 = inlined_call_operand.vmem [shape: bf16[128,312], index: 0, kind: input, shape index: {}]
  %s1 = inlined_call_operand.vmem [shape: bf16[312,128], index: 1, kind: input, shape index: {}]
  %s2 = inlined_call_operand.hbm [shape: f32[1,128], index: 2, kind: input, shape index: {}]
  %s3 = inlined_call_operand.vmem [shape: bf16[128,384], index: 3, kind: input, shape index: {}]
  %s4 = inlined_call_operand.vmem [shape: f32[1,384], index: 4, kind: input, shape index: {}]
  %s5 = inlined_call_operand.hbm [shape: bf16[384,128], index: 5, kind: input, shape index: {}]
  %s6 = inlined_call_operand.hbm [shape: f32[1,128], index: 6, kind: input, shape index: {}]
  %s7 = inlined_call_operand.hbm [shape: f32[2,128], index: 7, kind: output, shape index: {}]
  %s8 = sld [smem:[#allocation0]]
  $region50: #{tpu_custom_call.1} parent=0
    _
  %s10 = ssub.s32 1, %s8
  %s11 = scalar_select 0, %s10, %s8
  $region1: #{tpu_custom_call.1} parent=0
    #allocation2 [shape = 'u8[512]{0}', space=vmem, size = 0x400, scoped, tag = 'input window, operand 2, single buffered']
    #allocation3 [shape = 's32[1]{0}', space=sflag, size = 0x4, scoped, tag = 'scoped memory for tpu_custom_call.1']
    #allocation4 [shape = 's32[1]{0}', space=sflag, size = 0x4, scoped, tag = 'scoped memory for tpu_custom_call.1']
    #allocation5 [shape = 'u8[98304]{0}', space=vmem, size = 0x18000, scoped, tag = 'input window, operand 5, single buffered']
    #allocation6 [shape = 's32[1]{0}', space=sflag, size = 0x4, scoped, tag = 'scoped memory for tpu_custom_call.1']
    #allocation7 [shape = 'u8[512]{0}', space=vmem, size = 0x400, scoped, tag = 'input window, operand 6, single buffered']
    #allocation8 [shape = 'u8[1024]{0}', space=vmem, size = 0x400, scoped, tag = 'output window, operand 0, single buffered']
    %12 = vsyncpa [#allocation3], 0
    %13 = vsyncpa [#allocation6], 0
    %14 = vsyncpa [#allocation4], 0
    // Predicated region
    $region2: #{tpu_custom_call.1} parent=1 // pred_check
      _
    $region3: #{tpu_custom_call.1} parent=1 // pred_check_branch
      %16 = sbr.rel (0) target = $region5
    $region4: #{tpu_custom_call.1} parent=1 // pred_region
      _
    $region5: #{tpu_custom_call.1} parent=1 // pred_fallthru
      _
    // Predicated region
    $region6: #{tpu_custom_call.1} parent=1 // pred_check
      _
    $region7: #{tpu_custom_call.1} parent=1 // pred_check_branch
      %18 = sbr.rel (0) target = $region9
    $region8: #{tpu_custom_call.1} parent=1 // pred_region
      _
    $region9: #{tpu_custom_call.1} parent=1 // pred_fallthru
      _
    // Predicated region
    $region10: #{tpu_custom_call.1} parent=1 // pred_check
      _
    $region11: #{tpu_custom_call.1} parent=1 // pred_check_branch
      %20 = sbr.rel (0) target = $region13
    $region12: #{tpu_custom_call.1} parent=1 // pred_region
      %22 = vsyncadd [#allocation3], 0
      %s24 = sshll.u32 %s2, 4
      %s25 = int_to_ptr.hbm [resolvable:$true] %s24
      %s26 = sshll.u32 [#allocation2], 4
      %s27 = int_to_ptr.vmem [resolvable:$true] %s26
      %29 = dma.hbm_to_vmem [thread:$0]  %s25, 16, %s27, [#allocation3]
    $region13: #{tpu_custom_call.1} parent=1 // pred_fallthru
      _
    // Predicated region
    $region14: #{tpu_custom_call.1} parent=1 // pred_check
      _
    $region15: #{tpu_custom_call.1} parent=1 // pred_check_branch
      %31 = sbr.rel (0) target = $region17
    $region16: #{tpu_custom_call.1} parent=1 // pred_region
      _
    $region17: #{tpu_custom_call.1} parent=1 // pred_fallthru
      _
    // Predicated region
    $region18: #{tpu_custom_call.1} parent=1 // pred_check
      _
    $region19: #{tpu_custom_call.1} parent=1 // pred_check_branch
      %33 = sbr.rel (0) target = $region21
    $region20: #{tpu_custom_call.1} parent=1 // pred_region
      _
    $region21: #{tpu_custom_call.1} parent=1 // pred_fallthru
      _
    // Predicated region
    $region22: #{tpu_custom_call.1} parent=1 // pred_check
      _
    $region23: #{tpu_custom_call.1} parent=1 // pred_check_branch
      %35 = sbr.rel (0) target = $region25
    $region24: #{tpu_custom_call.1} parent=1 // pred_region
      %37 = vsyncadd [#allocation6], 0
      %s38 = sshll.u32 %s5, 4
      %s39 = int_to_ptr.hbm [resolvable:$true] %s38
      %s40 = sshll.u32 [#allocation5], 4
      %s41 = int_to_ptr.vmem [resolvable:$true] %s40
      %46 = dma.hbm_to_vmem [thread:$0]  %s39, 3072, %s41, [#allocation6], 64, 64, 4
    $region25: #{tpu_custom_call.1} parent=1 // pred_fallthru
      _
    // Predicated region
    $region26: #{tpu_custom_call.1} parent=1 // pred_check
      _
    $region27: #{tpu_custom_call.1} parent=1 // pred_check_branch
      %48 = sbr.rel (0) target = $region29
    $region28: #{tpu_custom_call.1} parent=1 // pred_region
      %50 = vsyncadd [#allocation6], 0
      %s52 = sshll.u32 %s6, 4
      %s53 = int_to_ptr.hbm [resolvable:$true] %s52
      %s54 = sshll.u32 [#allocation7], 4
      %s55 = int_to_ptr.vmem [resolvable:$true] %s54
      %57 = dma.hbm_to_vmem [thread:$0]  %s53, 16, %s55, [#allocation6]
    $region29: #{tpu_custom_call.1} parent=1 // pred_fallthru
      _
    // Predicated region
    $region30: #{tpu_custom_call.1} parent=1 // pred_check
      _
    $region31: #{tpu_custom_call.1} parent=1 // pred_check_branch
      %59 = sbr.rel (0) target = $region33
    $region32: #{tpu_custom_call.1} parent=1 // pred_region
      %61 = dma.done [#allocation3], 16
    $region33: #{tpu_custom_call.1} parent=1 // pred_fallthru
      _
    // Predicated region
    $region34: #{tpu_custom_call.1} parent=1 // pred_check
      _
    $region35: #{tpu_custom_call.1} parent=1 // pred_check_branch
      %63 = sbr.rel (0) target = $region37
    $region36: #{tpu_custom_call.1} parent=1 // pred_region
      %65 = dma.done [#allocation6], 3072
    $region37: #{tpu_custom_call.1} parent=1 // pred_fallthru
      _
    // Predicated region
    $region38: #{tpu_custom_call.1} parent=1 // pred_check
      _
    $region39: #{tpu_custom_call.1} parent=1 // pred_check_branch
      %67 = sbr.rel (0) target = $region41
    $region40: #{tpu_custom_call.1} parent=1 // pred_region
      %69 = dma.done [#allocation6], 16
    $region41: #{tpu_custom_call.1} parent=1 // pred_fallthru
      _
    %v71 = vld [vmem:[%s0] sm:$0xff]
    %v72 = vld [vmem:[%s0 + $0x8] sm:$0xf]
    %v73 = vld [vmem:[%s0 + $0xc] sm:$0xff]
    %v74 = vld [vmem:[%s0 + $0x14] sm:$0xf]
    %v75 = vld [vmem:[%s0 + $0x18] sm:$0xff]
    %v76 = vld [vmem:[%s0 + $0x20] sm:$0xf]
    %v77 = vld [vmem:[%s0 + $0x24] sm:$0xff]
    %v78 = vld [vmem:[%s0 + $0x2c] sm:$0xf]
    %v79 = vld [vmem:[%s0 + $0x30] sm:$0xff]
    %v80 = vld [vmem:[%s0 + $0x38] sm:$0xf]
    %v81 = vld [vmem:[%s0 + $0x3c] sm:$0xff]
    %v82 = vld [vmem:[%s0 + $0x44] sm:$0xf]
    %v83 = vld [vmem:[%s0 + $0x48] sm:$0xff]
    %v84 = vld [vmem:[%s0 + $0x50] sm:$0xf]
    %v85 = vld [vmem:[%s0 + $0x54] sm:$0xff]
    %v86 = vld [vmem:[%s0 + $0x5c] sm:$0xf]
    %v87 = vld [vmem:[%s0 + $0x60] sm:$0xff]
    %v88 = vld [vmem:[%s0 + $0x68] sm:$0xf]
    %v89 = vld [vmem:[%s0 + $0x6c] sm:$0xff]
    %v90 = vld [vmem:[%s0 + $0x74] sm:$0xf]
    %v91 = vld [vmem:[%s0 + $0x78] sm:$0xff]
    %v92 = vld [vmem:[%s0 + $0x80] sm:$0xf]
    %v93 = vld [vmem:[%s0 + $0x84] sm:$0xff]
    %v94 = vld [vmem:[%s0 + $0x8c] sm:$0xf]
    %v95 = vld [vmem:[%s0 + $0x90] sm:$0xff]
    %v96 = vld [vmem:[%s0 + $0x98] sm:$0xf]
    %v97 = vld [vmem:[%s0 + $0x9c] sm:$0xff]
    %v98 = vld [vmem:[%s0 + $0xa4] sm:$0xf]
    %v99 = vld [vmem:[%s0 + $0xa8] sm:$0xff]
    %v100 = vld [vmem:[%s0 + $0xb0] sm:$0xf]
    %v101 = vld [vmem:[%s0 + $0xb4] sm:$0xff]
    %v102 = vld [vmem:[%s0 + $0xbc] sm:$0xf]
    %v103 = vld [vmem:[%s1] sm:$0xf]
    %v104 = vld [vmem:[%s1 + $0x4] sm:$0xf]
    %v105 = vld [vmem:[%s1 + $0x8] sm:$0xf]
    %v106 = vld [vmem:[%s1 + $0xc] sm:$0xf]
    %v107 = vld [vmem:[%s1 + $0x10] sm:$0xf]
    %v108 = vld [vmem:[%s1 + $0x14] sm:$0xf]
    %v109 = vld [vmem:[%s1 + $0x18] sm:$0xf]
    %v110 = vld [vmem:[%s1 + $0x1c] sm:$0xf]
    %v111 = vld [vmem:[%s1 + $0x20] sm:$0xf]
    %v112 = vld [vmem:[%s1 + $0x24] sm:$0xf]
    %v113 = vld [vmem:[%s1 + $0x28] sm:$0xf]
    %v114 = vld [vmem:[%s1 + $0x2c] sm:$0xf]
    %v115 = vld [vmem:[%s1 + $0x30] sm:$0xf]
    %v116 = vld [vmem:[%s1 + $0x34] sm:$0xf]
    %v117 = vld [vmem:[%s1 + $0x38] sm:$0xf]
    %v118 = vld [vmem:[%s1 + $0x3c] sm:$0xf]
    %v119 = vld [vmem:[%s1 + $0x40] sm:$0xf]
    %v120 = vld [vmem:[%s1 + $0x44] sm:$0xf]
    %v121 = vld [vmem:[%s1 + $0x48] sm:$0xf]
    %v122 = vld [vmem:[%s1 + $0x4c] sm:$0xf]
    %v123 = vld [vmem:[%s1 + $0x50] sm:$0xf]
    %v124 = vld [vmem:[%s1 + $0x54] sm:$0xf]
    %v125 = vld [vmem:[%s1 + $0x58] sm:$0xf]
    %v126 = vld [vmem:[%s1 + $0x5c] sm:$0xf]
    %v127 = vld [vmem:[%s1 + $0x60] sm:$0xf]
    %v128 = vld [vmem:[%s1 + $0x64] sm:$0xf]
    %v129 = vld [vmem:[%s1 + $0x68] sm:$0xf]
    %v130 = vld [vmem:[%s1 + $0x6c] sm:$0xf]
    %v131 = vld [vmem:[%s1 + $0x70] sm:$0xf]
    %v132 = vld [vmem:[%s1 + $0x74] sm:$0xf]
    %v133 = vld [vmem:[%s1 + $0x78] sm:$0xf]
    %v134 = vld [vmem:[%s1 + $0x7c] sm:$0xf]
    %v135 = vld [vmem:[%s1 + $0x80] sm:$0xf]
    %v136 = vld [vmem:[%s1 + $0x84] sm:$0xf]
    %v137 = vld [vmem:[%s1 + $0x88] sm:$0xf]
    %v138 = vld [vmem:[%s1 + $0x8c] sm:$0xf]
    %v139 = vld [vmem:[%s1 + $0x90] sm:$0xf]
    %v140 = vld [vmem:[%s1 + $0x94] sm:$0xf]
    %v141 = vld [vmem:[%s1 + $0x98] sm:$0xf]
    %v142 = vld [vmem:[#allocation2] sm:$0x1]
    %v144 = vperm.slane %v142, 0
    %v178 = vunpack.c.l.b16 %v71
    %v179 = vunpack.c.h.b16 %v71
    %v180 = vunpack.c.l.b16 %v72
    %v181 = vunpack.c.l.b16 %v73
    %v182 = vunpack.c.h.b16 %v73
    %v183 = vunpack.c.l.b16 %v74
    %v184 = vunpack.c.l.b16 %v75
    %v185 = vunpack.c.h.b16 %v75
    %v186 = vunpack.c.l.b16 %v76
    %v187 = vunpack.c.l.b16 %v77
    %v188 = vunpack.c.h.b16 %v77
    %v189 = vunpack.c.l.b16 %v78
    %v190 = vunpack.c.l.b16 %v79
    %v191 = vunpack.c.h.b16 %v79
    %v192 = vunpack.c.l.b16 %v80
    %v193 = vunpack.c.l.b16 %v81
    %v194 = vunpack.c.h.b16 %v81
    %v195 = vunpack.c.l.b16 %v82
    %v196 = vunpack.c.l.b16 %v83
    %v197 = vunpack.c.h.b16 %v83
    %v198 = vunpack.c.l.b16 %v84
    %v199 = vunpack.c.l.b16 %v85
    %v200 = vunpack.c.h.b16 %v85
    %v201 = vunpack.c.l.b16 %v86
    %v202 = vunpack.c.l.b16 %v87
    %v203 = vunpack.c.h.b16 %v87
    %v204 = vunpack.c.l.b16 %v88
    %v205 = vunpack.c.l.b16 %v89
    %v206 = vunpack.c.h.b16 %v89
    %v207 = vunpack.c.l.b16 %v90
    %v208 = vunpack.c.l.b16 %v91
    %v209 = vunpack.c.h.b16 %v91
    %v210 = vunpack.c.l.b16 %v92
    %v211 = vunpack.c.l.b16 %v93
    %v212 = vunpack.c.h.b16 %v93
    %v213 = vunpack.c.l.b16 %v94
    %v214 = vunpack.c.l.b16 %v95
    %v215 = vunpack.c.h.b16 %v95
    %v216 = vunpack.c.l.b16 %v96
    %v217 = vunpack.c.l.b16 %v97
    %v218 = vunpack.c.h.b16 %v97
    %v219 = vunpack.c.l.b16 %v98
    %v220 = vunpack.c.l.b16 %v99
    %v221 = vunpack.c.h.b16 %v99
    %v222 = vunpack.c.l.b16 %v100
    %v223 = vunpack.c.l.b16 %v101
    %v224 = vunpack.c.h.b16 %v101
    %v225 = vunpack.c.l.b16 %v102
    %v226 = vpack.c.b16 %v181, %v178
    %v227 = vpack.c.b16 %v182, %v179
    %v228 = vpack.c.b16 %v183, %v180
    %v229 = vpack.c.b16 %v187, %v184
    %v230 = vpack.c.b16 %v188, %v185
    %v231 = vpack.c.b16 %v189, %v186
    %v232 = vpack.c.b16 %v193, %v190
    %v233 = vpack.c.b16 %v194, %v191
    %v234 = vpack.c.b16 %v195, %v192
    %v235 = vpack.c.b16 %v199, %v196
    %v236 = vpack.c.b16 %v200, %v197
    %v237 = vpack.c.b16 %v201, %v198
    %v238 = vpack.c.b16 %v205, %v202
    %v239 = vpack.c.b16 %v206, %v203
    %v240 = vpack.c.b16 %v207, %v204
    %v241 = vpack.c.b16 %v211, %v208
    %v242 = vpack.c.b16 %v212, %v209
    %v243 = vpack.c.b16 %v213, %v210
    %v244 = vpack.c.b16 %v217, %v214
    %v245 = vpack.c.b16 %v218, %v215
    %v246 = vpack.c.b16 %v219, %v216
    %v247 = vpack.c.b16 %v223, %v220
    %v248 = vpack.c.b16 %v224, %v221
    %v249 = vpack.c.b16 %v225, %v222
    %v305 = vunpack.c.l.b16 %v103
    %v306 = vunpack.c.l.b16 %v104
    %v307 = vunpack.c.l.b16 %v105
    %v308 = vunpack.c.l.b16 %v106
    %v309 = vunpack.c.l.b16 %v107
    %v310 = vunpack.c.l.b16 %v108
    %v311 = vunpack.c.l.b16 %v109
    %v312 = vunpack.c.l.b16 %v110
    %v313 = vunpack.c.l.b16 %v111
    %v314 = vunpack.c.l.b16 %v112
    %v315 = vunpack.c.l.b16 %v113
    %v316 = vunpack.c.l.b16 %v114
    %v317 = vunpack.c.l.b16 %v115
    %v318 = vunpack.c.l.b16 %v116
    %v319 = vunpack.c.l.b16 %v117
    %v320 = vunpack.c.l.b16 %v118
    %v321 = vunpack.c.l.b16 %v119
    %v322 = vunpack.c.l.b16 %v120
    %v323 = vunpack.c.l.b16 %v121
    %v324 = vunpack.c.l.b16 %v122
    %v325 = vunpack.c.l.b16 %v123
    %v326 = vunpack.c.l.b16 %v124
    %v327 = vunpack.c.l.b16 %v125
    %v328 = vunpack.c.l.b16 %v126
    %v329 = vunpack.c.l.b16 %v127
    %v330 = vunpack.c.l.b16 %v128
    %v331 = vunpack.c.l.b16 %v129
    %v332 = vunpack.c.l.b16 %v130
    %v333 = vunpack.c.l.b16 %v131
    %v334 = vunpack.c.l.b16 %v132
    %v335 = vunpack.c.l.b16 %v133
    %v336 = vunpack.c.l.b16 %v134
    %v337 = vunpack.c.l.b16 %v135
    %v338 = vunpack.c.l.b16 %v136
    %v339 = vunpack.c.l.b16 %v137
    %v340 = vunpack.c.l.b16 %v138
    %v341 = vunpack.c.l.b16 %v139
    %v342 = vunpack.c.l.b16 %v140
    %v343 = vunpack.c.l.b16 %v141
    %v344 = vpack.c.b16 %v306, %v305
    %v345 = vpack.c.b16 %v308, %v307
    %v346 = vpack.c.b16 %v310, %v309
    %v347 = vpack.c.b16 %v312, %v311
    %v348 = vpack.c.b16 %v314, %v313
    %v349 = vpack.c.b16 %v316, %v315
    %v350 = vpack.c.b16 %v318, %v317
    %v351 = vpack.c.b16 %v320, %v319
    %v352 = vpack.c.b16 %v322, %v321
    %v353 = vpack.c.b16 %v324, %v323
    %v354 = vpack.c.b16 %v326, %v325
    %v355 = vpack.c.b16 %v328, %v327
    %v356 = vpack.c.b16 %v330, %v329
    %v357 = vpack.c.b16 %v332, %v331
    %v358 = vpack.c.b16 %v334, %v333
    %v359 = vpack.c.b16 %v336, %v335
    %v360 = vpack.c.b16 %v338, %v337
    %v361 = vpack.c.b16 %v340, %v339
    %v362 = vpack.c.b16 %v342, %v341
    %v363 = vpack.c.b16 %v343, %v343
    %vm383 = vcmask 457728
    %v385 = vsel %vm383, %v228, 0
    %v388 = vsel %vm383, %v231, 0
    %v391 = vsel %vm383, %v234, 0
    %v394 = vsel %vm383, %v237, 0
    %v397 = vsel %vm383, %v240, 0
    %v400 = vsel %vm383, %v243, 0
    %v403 = vsel %vm383, %v246, 0
    %v406 = vsel %vm383, %v249, 0
    %vm408 = vcmask 1043456
    %v410 = vsel %vm408, %v363, 0
    %412 = vmatpush.bf16.msra.mxu0 %v351
    %413 = vmatpush.bf16.msra.mxu0 %v350
    %414 = vmatpush.bf16.msra.mxu0 %v349
    %415 = vmatpush.bf16.msra.mxu0 %v348
    %416 = vmatpush.bf16.msra.mxu0 %v347
    %417 = vmatpush.bf16.msra.mxu0 %v346
    %418 = vmatpush.bf16.msra.mxu0 %v345
    %419 = vmatpush.bf16.msra.mxu0 %v344
    %420 = vmatmul.bf16.gmra.mxu0 %v226
    %v421 = vpop.f32.mrf.mxu0
    %v422 = vadd.f32 %v144, %v421
    %v423 = vpop.f32.mrf.mxu0
    %v424 = vadd.f32 %v144, %v423
    %425 = vmatmul.bf16.gmra.mxu0 %v229
    %v426 = vpop.f32.mrf.mxu0
    %v427 = vadd.f32 %v144, %v426
    %v428 = vpop.f32.mrf.mxu0
    %v429 = vadd.f32 %v144, %v428
    %430 = vmatmul.bf16.gmra.mxu0 %v232
    %v431 = vpop.f32.mrf.mxu0
    %v432 = vadd.f32 %v144, %v431
    %v433 = vpop.f32.mrf.mxu0
    %v434 = vadd.f32 %v144, %v433
    %435 = vmatmul.bf16.gmra.mxu0 %v235
    %v436 = vpop.f32.mrf.mxu0
    %v437 = vadd.f32 %v144, %v436
    %v438 = vpop.f32.mrf.mxu0
    %v439 = vadd.f32 %v144, %v438
    %440 = vmatmul.bf16.gmra.mxu0 %v238
    %v441 = vpop.f32.mrf.mxu0
    %v442 = vadd.f32 %v144, %v441
    %v443 = vpop.f32.mrf.mxu0
    %v444 = vadd.f32 %v144, %v443
    %445 = vmatmul.bf16.gmra.mxu0 %v241
    %v446 = vpop.f32.mrf.mxu0
    %v447 = vadd.f32 %v144, %v446
    %v448 = vpop.f32.mrf.mxu0
    %v449 = vadd.f32 %v144, %v448
    %450 = vmatmul.bf16.gmra.mxu0 %v244
    %v451 = vpop.f32.mrf.mxu0
    %v452 = vadd.f32 %v144, %v451
    %v453 = vpop.f32.mrf.mxu0
    %v454 = vadd.f32 %v144, %v453
    %455 = vmatmul.bf16.gmra.mxu0 %v247
    %v456 = vpop.f32.mrf.mxu0
    %v457 = vadd.f32 %v144, %v456
    %v458 = vpop.f32.mrf.mxu0
    %v459 = vadd.f32 %v144, %v458
    %460 = vdwg.mxu0
    %461 = vmatpush.bf16.msra.mxu0 %v359
    %462 = vmatpush.bf16.msra.mxu0 %v358
    %463 = vmatpush.bf16.msra.mxu0 %v357
    %464 = vmatpush.bf16.msra.mxu0 %v356
    %465 = vmatpush.bf16.msra.mxu0 %v355
    %466 = vmatpush.bf16.msra.mxu0 %v354
    %467 = vmatpush.bf16.msra.mxu0 %v353
    %468 = vmatpush.bf16.msra.mxu0 %v352
    %469 = vmatmul.bf16.gmra.mxu0 %v227
    %v470 = vpop.f32.mrf.mxu0
    %v471 = vadd.f32 %v422, %v470
    %v472 = vpop.f32.mrf.mxu0
    %v473 = vadd.f32 %v424, %v472
    %474 = vmatmul.bf16.gmra.mxu0 %v230
    %v475 = vpop.f32.mrf.mxu0
    %v476 = vadd.f32 %v427, %v475
    %v477 = vpop.f32.mrf.mxu0
    %v478 = vadd.f32 %v429, %v477
    %479 = vmatmul.bf16.gmra.mxu0 %v233
    %v480 = vpop.f32.mrf.mxu0
    %v481 = vadd.f32 %v432, %v480
    %v482 = vpop.f32.mrf.mxu0
    %v483 = vadd.f32 %v434, %v482
    %484 = vmatmul.bf16.gmra.mxu0 %v236
    %v485 = vpop.f32.mrf.mxu0
    %v486 = vadd.f32 %v437, %v485
    %v487 = vpop.f32.mrf.mxu0
    %v488 = vadd.f32 %v439, %v487
    %489 = vmatmul.bf16.gmra.mxu0 %v239
    %v490 = vpop.f32.mrf.mxu0
    %v491 = vadd.f32 %v442, %v490
    %v492 = vpop.f32.mrf.mxu0
    %v493 = vadd.f32 %v444, %v492
    %494 = vmatmul.bf16.gmra.mxu0 %v242
    %v495 = vpop.f32.mrf.mxu0
    %v496 = vadd.f32 %v447, %v495
    %v497 = vpop.f32.mrf.mxu0
    %v498 = vadd.f32 %v449, %v497
    %499 = vmatmul.bf16.gmra.mxu0 %v245
    %v500 = vpop.f32.mrf.mxu0
    %v501 = vadd.f32 %v452, %v500
    %v502 = vpop.f32.mrf.mxu0
    %v503 = vadd.f32 %v454, %v502
    %504 = vmatmul.bf16.gmra.mxu0 %v248
    %v505 = vpop.f32.mrf.mxu0
    %v506 = vadd.f32 %v457, %v505
    %v507 = vpop.f32.mrf.mxu0
    %v508 = vadd.f32 %v459, %v507
    %509 = vdwg.mxu0
    %510 = vmatpush.bf16.msra.mxu0 0
    %511 = vmatpush.bf16.msra.mxu0 0
    %512 = vmatpush.bf16.msra.mxu0 0
    %513 = vmatpush.bf16.msra.mxu0 0
    %514 = vmatpush.bf16.msra.mxu0 %v410
    %515 = vmatpush.bf16.msra.mxu0 %v362
    %516 = vmatpush.bf16.msra.mxu0 %v361
    %517 = vmatpush.bf16.msra.mxu0 %v360
    %518 = vmatmul.bf16.gmra.mxu0 %v385
    %v519 = vpop.f32.mrf.mxu0
    %v520 = vadd.f32 %v471, %v519
    %v521 = vpop.f32.mrf.mxu0
    %v522 = vadd.f32 %v473, %v521
    %523 = vmatmul.bf16.gmra.mxu0 %v388
    %v524 = vpop.f32.mrf.mxu0
    %v525 = vadd.f32 %v476, %v524
    %v526 = vpop.f32.mrf.mxu0
    %v527 = vadd.f32 %v478, %v526
    %528 = vmatmul.bf16.gmra.mxu0 %v391
    %v529 = vpop.f32.mrf.mxu0
    %v530 = vadd.f32 %v481, %v529
    %v531 = vpop.f32.mrf.mxu0
    %v532 = vadd.f32 %v483, %v531
    %533 = vmatmul.bf16.gmra.mxu0 %v394
    %v534 = vpop.f32.mrf.mxu0
    %v535 = vadd.f32 %v486, %v534
    %v536 = vpop.f32.mrf.mxu0
    %v537 = vadd.f32 %v488, %v536
    %538 = vmatmul.bf16.gmra.mxu0 %v397
    %v539 = vpop.f32.mrf.mxu0
    %v540 = vadd.f32 %v491, %v539
    %v541 = vpop.f32.mrf.mxu0
    %v542 = vadd.f32 %v493, %v541
    %543 = vmatmul.bf16.gmra.mxu0 %v400
    %v544 = vpop.f32.mrf.mxu0
    %v545 = vadd.f32 %v496, %v544
    %v546 = vpop.f32.mrf.mxu0
    %v547 = vadd.f32 %v498, %v546
    %548 = vmatmul.bf16.gmra.mxu0 %v403
    %v549 = vpop.f32.mrf.mxu0
    %v550 = vadd.f32 %v501, %v549
    %v551 = vpop.f32.mrf.mxu0
    %v552 = vadd.f32 %v503, %v551
    %553 = vmatmul.bf16.gmra.mxu0 %v406
    %v554 = vpop.f32.mrf.mxu0
    %v555 = vadd.f32 %v506, %v554
    %v556 = vpop.f32.mrf.mxu0
    %v557 = vadd.f32 %v508, %v556
    %558 = vdwg.mxu0
    %v559 = vmax.f32 %v520, 0.0
    %v560 = vmax.f32 %v522, 0.0
    %v561 = vmax.f32 %v525, 0.0
    %v562 = vmax.f32 %v527, 0.0
    %v563 = vmax.f32 %v530, 0.0
    %v564 = vmax.f32 %v532, 0.0
    %v565 = vmax.f32 %v535, 0.0
    %v566 = vmax.f32 %v537, 0.0
    %v567 = vmax.f32 %v540, 0.0
    %v568 = vmax.f32 %v542, 0.0
    %v569 = vmax.f32 %v545, 0.0
    %v570 = vmax.f32 %v547, 0.0
    %v571 = vmax.f32 %v550, 0.0
    %v572 = vmax.f32 %v552, 0.0
    %v573 = vmax.f32 %v555, 0.0
    %v574 = vmax.f32 %v557, 0.0
    %v575 = vpack.c.bf16 %v560, %v559
    %v576 = vpack.c.bf16 %v562, %v561
    %v577 = vpack.c.bf16 %v564, %v563
    %v578 = vpack.c.bf16 %v566, %v565
    %v579 = vpack.c.bf16 %v568, %v567
    %v580 = vpack.c.bf16 %v570, %v569
    %v581 = vpack.c.bf16 %v572, %v571
    %v582 = vpack.c.bf16 %v574, %v573
    %v583 = vld [vmem:[%s3] sm:$0xff]
    %v584 = vld [vmem:[%s3 + $0x8] sm:$0xf]
    %v585 = vld [vmem:[%s3 + $0xc] sm:$0xff]
    %v586 = vld [vmem:[%s3 + $0x14] sm:$0xf]
    %v587 = vld [vmem:[%s3 + $0x18] sm:$0xff]
    %v588 = vld [vmem:[%s3 + $0x20] sm:$0xf]
    %v589 = vld [vmem:[%s3 + $0x24] sm:$0xff]
    %v590 = vld [vmem:[%s3 + $0x2c] sm:$0xf]
    %v591 = vld [vmem:[%s3 + $0x30] sm:$0xff]
    %v592 = vld [vmem:[%s3 + $0x38] sm:$0xf]
    %v593 = vld [vmem:[%s3 + $0x3c] sm:$0xff]
    %v594 = vld [vmem:[%s3 + $0x44] sm:$0xf]
    %v595 = vld [vmem:[%s3 + $0x48] sm:$0xff]
    %v596 = vld [vmem:[%s3 + $0x50] sm:$0xf]
    %v597 = vld [vmem:[%s3 + $0x54] sm:$0xff]
    %v598 = vld [vmem:[%s3 + $0x5c] sm:$0xf]
    %v599 = vld [vmem:[%s3 + $0x60] sm:$0xff]
    %v600 = vld [vmem:[%s3 + $0x68] sm:$0xf]
    %v601 = vld [vmem:[%s3 + $0x6c] sm:$0xff]
    %v602 = vld [vmem:[%s3 + $0x74] sm:$0xf]
    %v603 = vld [vmem:[%s3 + $0x78] sm:$0xff]
    %v604 = vld [vmem:[%s3 + $0x80] sm:$0xf]
    %v605 = vld [vmem:[%s3 + $0x84] sm:$0xff]
    %v606 = vld [vmem:[%s3 + $0x8c] sm:$0xf]
    %v607 = vld [vmem:[%s3 + $0x90] sm:$0xff]
    %v608 = vld [vmem:[%s3 + $0x98] sm:$0xf]
    %v609 = vld [vmem:[%s3 + $0x9c] sm:$0xff]
    %v610 = vld [vmem:[%s3 + $0xa4] sm:$0xf]
    %v611 = vld [vmem:[%s3 + $0xa8] sm:$0xff]
    %v612 = vld [vmem:[%s3 + $0xb0] sm:$0xf]
    %v613 = vld [vmem:[%s3 + $0xb4] sm:$0xff]
    %v614 = vld [vmem:[%s3 + $0xbc] sm:$0xf]
    %v615 = vld [vmem:[%s4] sm:$0x7]
    %v617 = vperm.slane %v615, 0
    %v618 = vperm.slane %v615, 1
    %v619 = vperm.slane %v615, 2
    %v655 = vunpack.c.l.b16 %v583
    %v656 = vunpack.c.h.b16 %v583
    %v657 = vunpack.c.l.b16 %v584
    %v658 = vunpack.c.l.b16 %v585
    %v659 = vunpack.c.h.b16 %v585
    %v660 = vunpack.c.l.b16 %v586
    %v661 = vunpack.c.l.b16 %v587
    %v662 = vunpack.c.h.b16 %v587
    %v663 = vunpack.c.l.b16 %v588
    %v664 = vunpack.c.l.b16 %v589
    %v665 = vunpack.c.h.b16 %v589
    %v666 = vunpack.c.l.b16 %v590
    %v667 = vunpack.c.l.b16 %v591
    %v668 = vunpack.c.h.b16 %v591
    %v669 = vunpack.c.l.b16 %v592
    %v670 = vunpack.c.l.b16 %v593
    %v671 = vunpack.c.h.b16 %v593
    %v672 = vunpack.c.l.b16 %v594
    %v673 = vunpack.c.l.b16 %v595
    %v674 = vunpack.c.h.b16 %v595
    %v675 = vunpack.c.l.b16 %v596
    %v676 = vunpack.c.l.b16 %v597
    %v677 = vunpack.c.h.b16 %v597
    %v678 = vunpack.c.l.b16 %v598
    %v679 = vunpack.c.l.b16 %v599
    %v680 = vunpack.c.h.b16 %v599
    %v681 = vunpack.c.l.b16 %v600
    %v682 = vunpack.c.l.b16 %v601
    %v683 = vunpack.c.h.b16 %v601
    %v684 = vunpack.c.l.b16 %v602
    %v685 = vunpack.c.l.b16 %v603
    %v686 = vunpack.c.h.b16 %v603
    %v687 = vunpack.c.l.b16 %v604
    %v688 = vunpack.c.l.b16 %v605
    %v689 = vunpack.c.h.b16 %v605
    %v690 = vunpack.c.l.b16 %v606
    %v691 = vunpack.c.l.b16 %v607
    %v692 = vunpack.c.h.b16 %v607
    %v693 = vunpack.c.l.b16 %v608
    %v694 = vunpack.c.l.b16 %v609
    %v695 = vunpack.c.h.b16 %v609
    %v696 = vunpack.c.l.b16 %v610
    %v697 = vunpack.c.l.b16 %v611
    %v698 = vunpack.c.h.b16 %v611
    %v699 = vunpack.c.l.b16 %v612
    %v700 = vunpack.c.l.b16 %v613
    %v701 = vunpack.c.h.b16 %v613
    %v702 = vunpack.c.l.b16 %v614
    %v703 = vpack.c.b16 %v658, %v655
    %v704 = vpack.c.b16 %v659, %v656
    %v705 = vpack.c.b16 %v660, %v657
    %v706 = vpack.c.b16 %v664, %v661
    %v707 = vpack.c.b16 %v665, %v662
    %v708 = vpack.c.b16 %v666, %v663
    %v709 = vpack.c.b16 %v670, %v667
    %v710 = vpack.c.b16 %v671, %v668
    %v711 = vpack.c.b16 %v672, %v669
    %v712 = vpack.c.b16 %v676, %v673
    %v713 = vpack.c.b16 %v677, %v674
    %v714 = vpack.c.b16 %v678, %v675
    %v715 = vpack.c.b16 %v682, %v679
    %v716 = vpack.c.b16 %v683, %v680
    %v717 = vpack.c.b16 %v684, %v681
    %v718 = vpack.c.b16 %v688, %v685
    %v719 = vpack.c.b16 %v689, %v686
    %v720 = vpack.c.b16 %v690, %v687
    %v721 = vpack.c.b16 %v694, %v691
    %v722 = vpack.c.b16 %v695, %v692
    %v723 = vpack.c.b16 %v696, %v693
    %v724 = vpack.c.b16 %v700, %v697
    %v725 = vpack.c.b16 %v701, %v698
    %v726 = vpack.c.b16 %v702, %v699
    %751 = vmatpush.bf16.msra.mxu0 %v724
    %752 = vmatpush.bf16.msra.mxu0 %v721
    %753 = vmatpush.bf16.msra.mxu0 %v718
    %754 = vmatpush.bf16.msra.mxu0 %v715
    %755 = vmatpush.bf16.msra.mxu0 %v712
    %756 = vmatpush.bf16.msra.mxu0 %v709
    %757 = vmatpush.bf16.msra.mxu0 %v706
    %758 = vmatpush.bf16.msra.mxu0 %v703
    %759 = vmatmul.bf16.gmra.mxu0 %v575
    %v760 = vpop.f32.mrf.mxu0
    %v761 = vadd.f32 %v617, %v760
    %v762 = vpop.f32.mrf.mxu0
    %v763 = vadd.f32 %v617, %v762
    %764 = vmatmul.bf16.gmra.mxu0 %v576
    %v765 = vpop.f32.mrf.mxu0
    %v766 = vadd.f32 %v617, %v765
    %v767 = vpop.f32.mrf.mxu0
    %v768 = vadd.f32 %v617, %v767
    %769 = vmatmul.bf16.gmra.mxu0 %v577
    %v770 = vpop.f32.mrf.mxu0
    %v771 = vadd.f32 %v617, %v770
    %v772 = vpop.f32.mrf.mxu0
    %v773 = vadd.f32 %v617, %v772
    %774 = vmatmul.bf16.gmra.mxu0 %v578
    %v775 = vpop.f32.mrf.mxu0
    %v776 = vadd.f32 %v617, %v775
    %v777 = vpop.f32.mrf.mxu0
    %v778 = vadd.f32 %v617, %v777
    %779 = vmatmul.bf16.gmra.mxu0 %v579
    %v780 = vpop.f32.mrf.mxu0
    %v781 = vadd.f32 %v617, %v780
    %v782 = vpop.f32.mrf.mxu0
    %v783 = vadd.f32 %v617, %v782
    %784 = vmatmul.bf16.gmra.mxu0 %v580
    %v785 = vpop.f32.mrf.mxu0
    %v786 = vadd.f32 %v617, %v785
    %v787 = vpop.f32.mrf.mxu0
    %v788 = vadd.f32 %v617, %v787
    %789 = vmatmul.bf16.gmra.mxu0 %v581
    %v790 = vpop.f32.mrf.mxu0
    %v791 = vadd.f32 %v617, %v790
    %v792 = vpop.f32.mrf.mxu0
    %v793 = vadd.f32 %v617, %v792
    %794 = vmatmul.bf16.gmra.mxu0 %v582
    %v795 = vpop.f32.mrf.mxu0
    %v796 = vadd.f32 %v617, %v795
    %v797 = vpop.f32.mrf.mxu0
    %v798 = vadd.f32 %v617, %v797
    %799 = vdwg.mxu0
    %800 = vmatpush.bf16.msra.mxu0 %v725
    %801 = vmatpush.bf16.msra.mxu0 %v722
    %802 = vmatpush.bf16.msra.mxu0 %v719
    %803 = vmatpush.bf16.msra.mxu0 %v716
    %804 = vmatpush.bf16.msra.mxu0 %v713
    %805 = vmatpush.bf16.msra.mxu0 %v710
    %806 = vmatpush.bf16.msra.mxu0 %v707
    %807 = vmatpush.bf16.msra.mxu0 %v704
    %808 = vmatmul.bf16.gmra.mxu0 %v575
    %v809 = vpop.f32.mrf.mxu0
    %v810 = vadd.f32 %v618, %v809
    %v811 = vpop.f32.mrf.mxu0
    %v812 = vadd.f32 %v618, %v811
    %813 = vmatmul.bf16.gmra.mxu0 %v576
    %v814 = vpop.f32.mrf.mxu0
    %v815 = vadd.f32 %v618, %v814
    %v816 = vpop.f32.mrf.mxu0
    %v817 = vadd.f32 %v618, %v816
    %818 = vmatmul.bf16.gmra.mxu0 %v577
    %v819 = vpop.f32.mrf.mxu0
    %v820 = vadd.f32 %v618, %v819
    %v821 = vpop.f32.mrf.mxu0
    %v822 = vadd.f32 %v618, %v821
    %823 = vmatmul.bf16.gmra.mxu0 %v578
    %v824 = vpop.f32.mrf.mxu0
    %v825 = vadd.f32 %v618, %v824
    %v826 = vpop.f32.mrf.mxu0
    %v827 = vadd.f32 %v618, %v826
    %828 = vmatmul.bf16.gmra.mxu0 %v579
    %v829 = vpop.f32.mrf.mxu0
    %v830 = vadd.f32 %v618, %v829
    %v831 = vpop.f32.mrf.mxu0
    %v832 = vadd.f32 %v618, %v831
    %833 = vmatmul.bf16.gmra.mxu0 %v580
    %v834 = vpop.f32.mrf.mxu0
    %v835 = vadd.f32 %v618, %v834
    %v836 = vpop.f32.mrf.mxu0
    %v837 = vadd.f32 %v618, %v836
    %838 = vmatmul.bf16.gmra.mxu0 %v581
    %v839 = vpop.f32.mrf.mxu0
    %v840 = vadd.f32 %v618, %v839
    %v841 = vpop.f32.mrf.mxu0
    %v842 = vadd.f32 %v618, %v841
    %843 = vmatmul.bf16.gmra.mxu0 %v582
    %v844 = vpop.f32.mrf.mxu0
    %v845 = vadd.f32 %v618, %v844
    %v846 = vpop.f32.mrf.mxu0
    %v847 = vadd.f32 %v618, %v846
    %848 = vdwg.mxu0
    %849 = vmatpush.bf16.msra.mxu0 %v726
    %850 = vmatpush.bf16.msra.mxu0 %v723
    %851 = vmatpush.bf16.msra.mxu0 %v720
    %852 = vmatpush.bf16.msra.mxu0 %v717
    %853 = vmatpush.bf16.msra.mxu0 %v714
    %854 = vmatpush.bf16.msra.mxu0 %v711
    %855 = vmatpush.bf16.msra.mxu0 %v708
    %856 = vmatpush.bf16.msra.mxu0 %v705
    %857 = vmatmul.bf16.gmra.mxu0 %v575
    %v858 = vpop.f32.mrf.mxu0
    %v859 = vadd.f32 %v619, %v858
    %v860 = vpop.f32.mrf.mxu0
    %v861 = vadd.f32 %v619, %v860
    %862 = vmatmul.bf16.gmra.mxu0 %v576
    %v863 = vpop.f32.mrf.mxu0
    %v864 = vadd.f32 %v619, %v863
    %v865 = vpop.f32.mrf.mxu0
    %v866 = vadd.f32 %v619, %v865
    %867 = vmatmul.bf16.gmra.mxu0 %v577
    %v868 = vpop.f32.mrf.mxu0
    %v869 = vadd.f32 %v619, %v868
    %v870 = vpop.f32.mrf.mxu0
    %v871 = vadd.f32 %v619, %v870
    %872 = vmatmul.bf16.gmra.mxu0 %v578
    %v873 = vpop.f32.mrf.mxu0
    %v874 = vadd.f32 %v619, %v873
    %v875 = vpop.f32.mrf.mxu0
    %v876 = vadd.f32 %v619, %v875
    %877 = vmatmul.bf16.gmra.mxu0 %v579
    %v878 = vpop.f32.mrf.mxu0
    %v879 = vadd.f32 %v619, %v878
    %v880 = vpop.f32.mrf.mxu0
    %v881 = vadd.f32 %v619, %v880
    %882 = vmatmul.bf16.gmra.mxu0 %v580
    %v883 = vpop.f32.mrf.mxu0
    %v884 = vadd.f32 %v619, %v883
    %v885 = vpop.f32.mrf.mxu0
    %v886 = vadd.f32 %v619, %v885
    %887 = vmatmul.bf16.gmra.mxu0 %v581
    %v888 = vpop.f32.mrf.mxu0
    %v889 = vadd.f32 %v619, %v888
    %v890 = vpop.f32.mrf.mxu0
    %v891 = vadd.f32 %v619, %v890
    %892 = vmatmul.bf16.gmra.mxu0 %v582
    %v893 = vpop.f32.mrf.mxu0
    %v894 = vadd.f32 %v619, %v893
    %v895 = vpop.f32.mrf.mxu0
    %v896 = vadd.f32 %v619, %v895
    %897 = vdwg.mxu0
    %v898 = vmax.f32 %v761, 0.0
    %v899 = vmax.f32 %v810, 0.0
    %v900 = vmax.f32 %v859, 0.0
    %v901 = vmax.f32 %v763, 0.0
    %v902 = vmax.f32 %v812, 0.0
    %v903 = vmax.f32 %v861, 0.0
    %v904 = vmax.f32 %v766, 0.0
    %v905 = vmax.f32 %v815, 0.0
    %v906 = vmax.f32 %v864, 0.0
    %v907 = vmax.f32 %v768, 0.0
    %v908 = vmax.f32 %v817, 0.0
    %v909 = vmax.f32 %v866, 0.0
    %v910 = vmax.f32 %v771, 0.0
    %v911 = vmax.f32 %v820, 0.0
    %v912 = vmax.f32 %v869, 0.0
    %v913 = vmax.f32 %v773, 0.0
    %v914 = vmax.f32 %v822, 0.0
    %v915 = vmax.f32 %v871, 0.0
    %v916 = vmax.f32 %v776, 0.0
    %v917 = vmax.f32 %v825, 0.0
    %v918 = vmax.f32 %v874, 0.0
    %v919 = vmax.f32 %v778, 0.0
    %v920 = vmax.f32 %v827, 0.0
    %v921 = vmax.f32 %v876, 0.0
    %v922 = vmax.f32 %v781, 0.0
    %v923 = vmax.f32 %v830, 0.0
    %v924 = vmax.f32 %v879, 0.0
    %v925 = vmax.f32 %v783, 0.0
    %v926 = vmax.f32 %v832, 0.0
    %v927 = vmax.f32 %v881, 0.0
    %v928 = vmax.f32 %v786, 0.0
    %v929 = vmax.f32 %v835, 0.0
    %v930 = vmax.f32 %v884, 0.0
    %v931 = vmax.f32 %v788, 0.0
    %v932 = vmax.f32 %v837, 0.0
    %v933 = vmax.f32 %v886, 0.0
    %v934 = vmax.f32 %v791, 0.0
    %v935 = vmax.f32 %v840, 0.0
    %v936 = vmax.f32 %v889, 0.0
    %v937 = vmax.f32 %v793, 0.0
    %v938 = vmax.f32 %v842, 0.0
    %v939 = vmax.f32 %v891, 0.0
    %v940 = vmax.f32 %v796, 0.0
    %v941 = vmax.f32 %v845, 0.0
    %v942 = vmax.f32 %v894, 0.0
    %v943 = vmax.f32 %v798, 0.0
    %v944 = vmax.f32 %v847, 0.0
    %v945 = vmax.f32 %v896, 0.0
    %v946 = vpack.c.bf16 %v901, %v898
    %v947 = vpack.c.bf16 %v902, %v899
    %v948 = vpack.c.bf16 %v903, %v900
    %v949 = vpack.c.bf16 %v907, %v904
    %v950 = vpack.c.bf16 %v908, %v905
    %v951 = vpack.c.bf16 %v909, %v906
    %v952 = vpack.c.bf16 %v913, %v910
    %v953 = vpack.c.bf16 %v914, %v911
    %v954 = vpack.c.bf16 %v915, %v912
    %v955 = vpack.c.bf16 %v919, %v916
    %v956 = vpack.c.bf16 %v920, %v917
    %v957 = vpack.c.bf16 %v921, %v918
    %v958 = vpack.c.bf16 %v925, %v922
    %v959 = vpack.c.bf16 %v926, %v923
    %v960 = vpack.c.bf16 %v927, %v924
    %v961 = vpack.c.bf16 %v931, %v928
    %v962 = vpack.c.bf16 %v932, %v929
    %v963 = vpack.c.bf16 %v933, %v930
    %v964 = vpack.c.bf16 %v937, %v934
    %v965 = vpack.c.bf16 %v938, %v935
    %v966 = vpack.c.bf16 %v939, %v936
    %v967 = vpack.c.bf16 %v943, %v940
    %v968 = vpack.c.bf16 %v944, %v941
    %v969 = vpack.c.bf16 %v945, %v942
    %v970 = vld [vmem:[#allocation5] sm:$0xf]
    %v971 = vld [vmem:[#allocation5 + $0x4] sm:$0xf]
    %v972 = vld [vmem:[#allocation5 + $0x8] sm:$0xf]
    %v973 = vld [vmem:[#allocation5 + $0xc] sm:$0xf]
    %v974 = vld [vmem:[#allocation5 + $0x10] sm:$0xf]
    %v975 = vld [vmem:[#allocation5 + $0x14] sm:$0xf]
    %v976 = vld [vmem:[#allocation5 + $0x18] sm:$0xf]
    %v977 = vld [vmem:[#allocation5 + $0x1c] sm:$0xf]
    %v978 = vld [vmem:[#allocation5 + $0x20] sm:$0xf]
    %v979 = vld [vmem:[#allocation5 + $0x24] sm:$0xf]
    %v980 = vld [vmem:[#allocation5 + $0x28] sm:$0xf]
    %v981 = vld [vmem:[#allocation5 + $0x2c] sm:$0xf]
    %v982 = vld [vmem:[#allocation5 + $0x30] sm:$0xf]
    %v983 = vld [vmem:[#allocation5 + $0x34] sm:$0xf]
    %v984 = vld [vmem:[#allocation5 + $0x38] sm:$0xf]
    %v985 = vld [vmem:[#allocation5 + $0x3c] sm:$0xf]
    %v986 = vld [vmem:[#allocation5 + $0x40] sm:$0xf]
    %v987 = vld [vmem:[#allocation5 + $0x44] sm:$0xf]
    %v988 = vld [vmem:[#allocation5 + $0x48] sm:$0xf]
    %v989 = vld [vmem:[#allocation5 + $0x4c] sm:$0xf]
    %v990 = vld [vmem:[#allocation5 + $0x50] sm:$0xf]
    %v991 = vld [vmem:[#allocation5 + $0x54] sm:$0xf]
    %v992 = vld [vmem:[#allocation5 + $0x58] sm:$0xf]
    %v993 = vld [vmem:[#allocation5 + $0x5c] sm:$0xf]
    %v994 = vld [vmem:[#allocation5 + $0x60] sm:$0xf]
    %v995 = vld [vmem:[#allocation5 + $0x64] sm:$0xf]
    %v996 = vld [vmem:[#allocation5 + $0x68] sm:$0xf]
    %v997 = vld [vmem:[#allocation5 + $0x6c] sm:$0xf]
    %v998 = vld [vmem:[#allocation5 + $0x70] sm:$0xf]
    %v999 = vld [vmem:[#allocation5 + $0x74] sm:$0xf]
    %v1000 = vld [vmem:[#allocation5 + $0x78] sm:$0xf]
    %v1001 = vld [vmem:[#allocation5 + $0x7c] sm:$0xf]
    %v1002 = vld [vmem:[#allocation5 + $0x80] sm:$0xf]
    %v1003 = vld [vmem:[#allocation5 + $0x84] sm:$0xf]
    %v1004 = vld [vmem:[#allocation5 + $0x88] sm:$0xf]
    %v1005 = vld [vmem:[#allocation5 + $0x8c] sm:$0xf]
    %v1006 = vld [vmem:[#allocation5 + $0x90] sm:$0xf]
    %v1007 = vld [vmem:[#allocation5 + $0x94] sm:$0xf]
    %v1008 = vld [vmem:[#allocation5 + $0x98] sm:$0xf]
    %v1009 = vld [vmem:[#allocation5 + $0x9c] sm:$0xf]
    %v1010 = vld [vmem:[#allocation5 + $0xa0] sm:$0xf]
    %v1011 = vld [vmem:[#allocation5 + $0xa4] sm:$0xf]
    %v1012 = vld [vmem:[#allocation5 + $0xa8] sm:$0xf]
    %v1013 = vld [vmem:[#allocation5 + $0xac] sm:$0xf]
    %v1014 = vld [vmem:[#allocation5 + $0xb0] sm:$0xf]
    %v1015 = vld [vmem:[#allocation5 + $0xb4] sm:$0xf]
    %v1016 = vld [vmem:[#allocation5 + $0xb8] sm:$0xf]
    %v1017 = vld [vmem:[#allocation5 + $0xbc] sm:$0xf]
    %v1018 = vld [vmem:[#allocation7] sm:$0x1]
    %v1020 = vperm.slane %v1018, 0
    %v1070 = vunpack.c.l.b16 %v970
    %v1071 = vunpack.c.l.b16 %v971
    %v1072 = vunpack.c.l.b16 %v972
    %v1073 = vunpack.c.l.b16 %v973
    %v1074 = vunpack.c.l.b16 %v974
    %v1075 = vunpack.c.l.b16 %v975
    %v1076 = vunpack.c.l.b16 %v976
    %v1077 = vunpack.c.l.b16 %v977
    %v1078 = vunpack.c.l.b16 %v978
    %v1079 = vunpack.c.l.b16 %v979
    %v1080 = vunpack.c.l.b16 %v980
    %v1081 = vunpack.c.l.b16 %v981
    %v1082 = vunpack.c.l.b16 %v982
    %v1083 = vunpack.c.l.b16 %v983
    %v1084 = vunpack.c.l.b16 %v984
    %v1085 = vunpack.c.l.b16 %v985
    %v1086 = vunpack.c.l.b16 %v986
    %v1087 = vunpack.c.l.b16 %v987
    %v1088 = vunpack.c.l.b16 %v988
    %v1089 = vunpack.c.l.b16 %v989
    %v1090 = vunpack.c.l.b16 %v990
    %v1091 = vunpack.c.l.b16 %v991
    %v1092 = vunpack.c.l.b16 %v992
    %v1093 = vunpack.c.l.b16 %v993
    %v1094 = vunpack.c.l.b16 %v994
    %v1095 = vunpack.c.l.b16 %v995
    %v1096 = vunpack.c.l.b16 %v996
    %v1097 = vunpack.c.l.b16 %v997
    %v1098 = vunpack.c.l.b16 %v998
    %v1099 = vunpack.c.l.b16 %v999
    %v1100 = vunpack.c.l.b16 %v1000
    %v1101 = vunpack.c.l.b16 %v1001
    %v1102 = vunpack.c.l.b16 %v1002
    %v1103 = vunpack.c.l.b16 %v1003
    %v1104 = vunpack.c.l.b16 %v1004
    %v1105 = vunpack.c.l.b16 %v1005
    %v1106 = vunpack.c.l.b16 %v1006
    %v1107 = vunpack.c.l.b16 %v1007
    %v1108 = vunpack.c.l.b16 %v1008
    %v1109 = vunpack.c.l.b16 %v1009
    %v1110 = vunpack.c.l.b16 %v1010
    %v1111 = vunpack.c.l.b16 %v1011
    %v1112 = vunpack.c.l.b16 %v1012
    %v1113 = vunpack.c.l.b16 %v1013
    %v1114 = vunpack.c.l.b16 %v1014
    %v1115 = vunpack.c.l.b16 %v1015
    %v1116 = vunpack.c.l.b16 %v1016
    %v1117 = vunpack.c.l.b16 %v1017
    %v1118 = vpack.c.b16 %v1071, %v1070
    %v1119 = vpack.c.b16 %v1073, %v1072
    %v1120 = vpack.c.b16 %v1075, %v1074
    %v1121 = vpack.c.b16 %v1077, %v1076
    %v1122 = vpack.c.b16 %v1079, %v1078
    %v1123 = vpack.c.b16 %v1081, %v1080
    %v1124 = vpack.c.b16 %v1083, %v1082
    %v1125 = vpack.c.b16 %v1085, %v1084
    %v1126 = vpack.c.b16 %v1087, %v1086
    %v1127 = vpack.c.b16 %v1089, %v1088
    %v1128 = vpack.c.b16 %v1091, %v1090
    %v1129 = vpack.c.b16 %v1093, %v1092
    %v1130 = vpack.c.b16 %v1095, %v1094
    %v1131 = vpack.c.b16 %v1097, %v1096
    %v1132 = vpack.c.b16 %v1099, %v1098
    %v1133 = vpack.c.b16 %v1101, %v1100
    %v1134 = vpack.c.b16 %v1103, %v1102
    %v1135 = vpack.c.b16 %v1105, %v1104
    %v1136 = vpack.c.b16 %v1107, %v1106
    %v1137 = vpack.c.b16 %v1109, %v1108
    %v1138 = vpack.c.b16 %v1111, %v1110
    %v1139 = vpack.c.b16 %v1113, %v1112
    %v1140 = vpack.c.b16 %v1115, %v1114
    %v1141 = vpack.c.b16 %v1117, %v1116
    %1166 = vmatpush.bf16.msra.mxu0 %v1125
    %1167 = vmatpush.bf16.msra.mxu0 %v1124
    %1168 = vmatpush.bf16.msra.mxu0 %v1123
    %1169 = vmatpush.bf16.msra.mxu0 %v1122
    %1170 = vmatpush.bf16.msra.mxu0 %v1121
    %1171 = vmatpush.bf16.msra.mxu0 %v1120
    %1172 = vmatpush.bf16.msra.mxu0 %v1119
    %1173 = vmatpush.bf16.msra.mxu0 %v1118
    %1174 = vmatmul.bf16.gmra.mxu0 %v946
    %v1175 = vpop.f32.mrf.mxu0
    %v1176 = vadd.f32 %v1020, %v1175
    %v1177 = vpop.f32.mrf.mxu0
    %v1178 = vadd.f32 %v1020, %v1177
    %1179 = vmatmul.bf16.gmra.mxu0 %v949
    %v1180 = vpop.f32.mrf.mxu0
    %v1181 = vadd.f32 %v1020, %v1180
    %v1182 = vpop.f32.mrf.mxu0
    %v1183 = vadd.f32 %v1020, %v1182
    %1184 = vmatmul.bf16.gmra.mxu0 %v952
    %v1185 = vpop.f32.mrf.mxu0
    %v1186 = vadd.f32 %v1020, %v1185
    %v1187 = vpop.f32.mrf.mxu0
    %v1188 = vadd.f32 %v1020, %v1187
    %1189 = vmatmul.bf16.gmra.mxu0 %v955
    %v1190 = vpop.f32.mrf.mxu0
    %v1191 = vadd.f32 %v1020, %v1190
    %v1192 = vpop.f32.mrf.mxu0
    %v1193 = vadd.f32 %v1020, %v1192
    %1194 = vmatmul.bf16.gmra.mxu0 %v958
    %v1195 = vpop.f32.mrf.mxu0
    %v1196 = vadd.f32 %v1020, %v1195
    %v1197 = vpop.f32.mrf.mxu0
    %v1198 = vadd.f32 %v1020, %v1197
    %1199 = vmatmul.bf16.gmra.mxu0 %v961
    %v1200 = vpop.f32.mrf.mxu0
    %v1201 = vadd.f32 %v1020, %v1200
    %v1202 = vpop.f32.mrf.mxu0
    %v1203 = vadd.f32 %v1020, %v1202
    %1204 = vmatmul.bf16.gmra.mxu0 %v964
    %v1205 = vpop.f32.mrf.mxu0
    %v1206 = vadd.f32 %v1020, %v1205
    %v1207 = vpop.f32.mrf.mxu0
    %v1208 = vadd.f32 %v1020, %v1207
    %1209 = vmatmul.bf16.gmra.mxu0 %v967
    %v1210 = vpop.f32.mrf.mxu0
    %v1211 = vadd.f32 %v1020, %v1210
    %v1212 = vpop.f32.mrf.mxu0
    %v1213 = vadd.f32 %v1020, %v1212
    %1214 = vdwg.mxu0
    %1215 = vmatpush.bf16.msra.mxu0 %v1133
    %1216 = vmatpush.bf16.msra.mxu0 %v1132
    %1217 = vmatpush.bf16.msra.mxu0 %v1131
    %1218 = vmatpush.bf16.msra.mxu0 %v1130
    %1219 = vmatpush.bf16.msra.mxu0 %v1129
    %1220 = vmatpush.bf16.msra.mxu0 %v1128
    %1221 = vmatpush.bf16.msra.mxu0 %v1127
    %1222 = vmatpush.bf16.msra.mxu0 %v1126
    %1223 = vmatmul.bf16.gmra.mxu0 %v947
    %v1224 = vpop.f32.mrf.mxu0
    %v1225 = vadd.f32 %v1176, %v1224
    %v1226 = vpop.f32.mrf.mxu0
    %v1227 = vadd.f32 %v1178, %v1226
    %1228 = vmatmul.bf16.gmra.mxu0 %v950
    %v1229 = vpop.f32.mrf.mxu0
    %v1230 = vadd.f32 %v1181, %v1229
    %v1231 = vpop.f32.mrf.mxu0
    %v1232 = vadd.f32 %v1183, %v1231
    %1233 = vmatmul.bf16.gmra.mxu0 %v953
    %v1234 = vpop.f32.mrf.mxu0
    %v1235 = vadd.f32 %v1186, %v1234
    %v1236 = vpop.f32.mrf.mxu0
    %v1237 = vadd.f32 %v1188, %v1236
    %1238 = vmatmul.bf16.gmra.mxu0 %v956
    %v1239 = vpop.f32.mrf.mxu0
    %v1240 = vadd.f32 %v1191, %v1239
    %v1241 = vpop.f32.mrf.mxu0
    %v1242 = vadd.f32 %v1193, %v1241
    %1243 = vmatmul.bf16.gmra.mxu0 %v959
    %v1244 = vpop.f32.mrf.mxu0
    %v1245 = vadd.f32 %v1196, %v1244
    %v1246 = vpop.f32.mrf.mxu0
    %v1247 = vadd.f32 %v1198, %v1246
    %1248 = vmatmul.bf16.gmra.mxu0 %v962
    %v1249 = vpop.f32.mrf.mxu0
    %v1250 = vadd.f32 %v1201, %v1249
    %v1251 = vpop.f32.mrf.mxu0
    %v1252 = vadd.f32 %v1203, %v1251
    %1253 = vmatmul.bf16.gmra.mxu0 %v965
    %v1254 = vpop.f32.mrf.mxu0
    %v1255 = vadd.f32 %v1206, %v1254
    %v1256 = vpop.f32.mrf.mxu0
    %v1257 = vadd.f32 %v1208, %v1256
    %1258 = vmatmul.bf16.gmra.mxu0 %v968
    %v1259 = vpop.f32.mrf.mxu0
    %v1260 = vadd.f32 %v1211, %v1259
    %v1261 = vpop.f32.mrf.mxu0
    %v1262 = vadd.f32 %v1213, %v1261
    %1263 = vdwg.mxu0
    %1264 = vmatpush.bf16.msra.mxu0 %v1141
    %1265 = vmatpush.bf16.msra.mxu0 %v1140
    %1266 = vmatpush.bf16.msra.mxu0 %v1139
    %1267 = vmatpush.bf16.msra.mxu0 %v1138
    %1268 = vmatpush.bf16.msra.mxu0 %v1137
    %1269 = vmatpush.bf16.msra.mxu0 %v1136
    %1270 = vmatpush.bf16.msra.mxu0 %v1135
    %1271 = vmatpush.bf16.msra.mxu0 %v1134
    %1272 = vmatmul.bf16.gmra.mxu0 %v948
    %v1273 = vpop.f32.mrf.mxu0
    %v1274 = vadd.f32 %v1225, %v1273
    %v1275 = vpop.f32.mrf.mxu0
    %v1276 = vadd.f32 %v1227, %v1275
    %1277 = vmatmul.bf16.gmra.mxu0 %v951
    %v1278 = vpop.f32.mrf.mxu0
    %v1279 = vadd.f32 %v1230, %v1278
    %v1280 = vpop.f32.mrf.mxu0
    %v1281 = vadd.f32 %v1232, %v1280
    %1282 = vmatmul.bf16.gmra.mxu0 %v954
    %v1283 = vpop.f32.mrf.mxu0
    %v1284 = vadd.f32 %v1235, %v1283
    %v1285 = vpop.f32.mrf.mxu0
    %v1286 = vadd.f32 %v1237, %v1285
    %1287 = vmatmul.bf16.gmra.mxu0 %v957
    %v1288 = vpop.f32.mrf.mxu0
    %v1289 = vadd.f32 %v1240, %v1288
    %v1290 = vpop.f32.mrf.mxu0
    %v1291 = vadd.f32 %v1242, %v1290
    %1292 = vmatmul.bf16.gmra.mxu0 %v960
    %v1293 = vpop.f32.mrf.mxu0
    %v1294 = vadd.f32 %v1245, %v1293
    %v1295 = vpop.f32.mrf.mxu0
    %v1296 = vadd.f32 %v1247, %v1295
    %1297 = vmatmul.bf16.gmra.mxu0 %v963
    %v1298 = vpop.f32.mrf.mxu0
    %v1299 = vadd.f32 %v1250, %v1298
    %v1300 = vpop.f32.mrf.mxu0
    %v1301 = vadd.f32 %v1252, %v1300
    %1302 = vmatmul.bf16.gmra.mxu0 %v966
    %v1303 = vpop.f32.mrf.mxu0
    %v1304 = vadd.f32 %v1255, %v1303
    %v1305 = vpop.f32.mrf.mxu0
    %v1306 = vadd.f32 %v1257, %v1305
    %1307 = vmatmul.bf16.gmra.mxu0 %v969
    %v1308 = vpop.f32.mrf.mxu0
    %v1309 = vadd.f32 %v1260, %v1308
    %v1310 = vpop.f32.mrf.mxu0
    %v1311 = vadd.f32 %v1262, %v1310
    %1312 = vdwg.mxu0
    %1313 = vxpose.xlu0.b32.start [1/16] %v1274, 128
    %1314 = vxpose.xlu0.b32.cont [2/16] %v1276, 128
    %1315 = vxpose.xlu0.b32.cont [3/16] %v1279, 128
    %1316 = vxpose.xlu0.b32.cont [4/16] %v1281, 128
    %1317 = vxpose.xlu0.b32.cont [5/16] %v1284, 128
    %1318 = vxpose.xlu0.b32.cont [6/16] %v1286, 128
    %1319 = vxpose.xlu0.b32.cont [7/16] %v1289, 128
    %1320 = vxpose.xlu0.b32.cont [8/16] %v1291, 128
    %1321 = vxpose.xlu0.b32.cont [9/16] %v1294, 128
    %1322 = vxpose.xlu0.b32.cont [10/16] %v1296, 128
    %1323 = vxpose.xlu0.b32.cont [11/16] %v1299, 128
    %1324 = vxpose.xlu0.b32.cont [12/16] %v1301, 128
    %1325 = vxpose.xlu0.b32.cont [13/16] %v1304, 128
    %1326 = vxpose.xlu0.b32.cont [14/16] %v1306, 128
    %1327 = vxpose.xlu0.b32.cont [15/16] %v1309, 128
    %1328 = vxpose.xlu0.b32.end [16/16] %v1311, 128
    %v1329 = vpop.trf.xlu0
    %v1330 = vpop.trf.xlu0
    %v1331 = vpop.trf.xlu0
    %v1332 = vpop.trf.xlu0
    %v1333 = vpop.trf.xlu0
    %v1334 = vpop.trf.xlu0
    %v1335 = vpop.trf.xlu0
    %v1336 = vpop.trf.xlu0
    %v1337 = vpop.trf.xlu0
    %v1338 = vpop.trf.xlu0
    %v1339 = vpop.trf.xlu0
    %v1340 = vpop.trf.xlu0
    %v1341 = vpop.trf.xlu0
    %v1342 = vpop.trf.xlu0
    %v1343 = vpop.trf.xlu0
    %v1344 = vpop.trf.xlu0
    %1345 = vst [vmem:[#allocation8] sm:$0x3] %v1329
    // Predicated region
    $region42: #{tpu_custom_call.1} parent=1 // pred_check
      _
    $region43: #{tpu_custom_call.1} parent=1 // pred_check_branch
      %1347 = sbr.rel (0) target = $region45
    $region44: #{tpu_custom_call.1} parent=1 // pred_region
      %1349 = vsyncadd [#allocation4], 0
      %s1351 = sshll.u32 [#allocation8], 4
      %s1352 = int_to_ptr.vmem [resolvable:$true] %s1351
      %s1353 = sshll.u32 %s7, 4
      %s1354 = int_to_ptr.hbm [resolvable:$true] %s1353
      %1356 = dma.vmem_to_hbm [thread:$0]  %s1352, 32, %s1354, [#allocation4]
    $region45: #{tpu_custom_call.1} parent=1 // pred_fallthru
      _
    // Predicated region
    $region46: #{tpu_custom_call.1} parent=1 // pred_check
      _
    $region47: #{tpu_custom_call.1} parent=1 // pred_check_branch
      %1358 = sbr.rel (0) target = $region49
    $region48: #{tpu_custom_call.1} parent=1 // pred_region
      %1360 = dma.done [#allocation4], 32
    $region49: #{tpu_custom_call.1} parent=1 // pred_fallthru
      _
    %1361 = vsyncpa [#allocation3], 1
    %1362 = vsyncpa [#allocation6], 1
    %1363 = vsyncpa [#allocation4], 1

</llo_original>
